<compile_context>
chip_gen: v6e
topology: v6e:2x2x1
jax: 0.10.0
libtpu: 0.0.40
codegen_flags: <defaults>
</compile_context>

<pallas_src>
import jax
import jax.numpy as jnp
from jax.experimental import pallas as pl
from jax.experimental.pallas import tpu as pltpu

SUBLANE = 8
LANE = 128
WEIGHT_VMEM_BUDGET = 24 << 20      # resident-weight budget before hid tiling
_VMEM_LIMIT_FLOOR = 32 << 20
_VMEM_LIMIT_CEIL = 64 << 20        # v7x physical VMEM per TensorCore


def _round_up(n, m):
    return ((n + m - 1) // m) * m


def _compiler_params(need_bytes, dimension_semantics=None):
    limit = int(min(max(need_bytes + (4 << 20), _VMEM_LIMIT_FLOOR),
                    _VMEM_LIMIT_CEIL))
    return pltpu.CompilerParams(dimension_semantics=dimension_semantics,
                                vmem_limit_bytes=limit)


# --------------------------------------------------------------------------- #
# Kernels
# --------------------------------------------------------------------------- #
def _fused_kernel(x_ref, w1_ref, b1_ref, w2_ref, b2_ref, o_ref):
    """Fully fused, VMEM-resident: matmul -> bias -> ReLU -> matmul -> bias."""
    x = x_ref[...].astype(w1_ref.dtype)            # free in-vreg cast (bf16 MXU path)
    h = jnp.dot(x, w1_ref[...], preferred_element_type=jnp.float32) + b1_ref[...]
    h = jnp.maximum(h, 0.0)
    y = jnp.dot(h.astype(w2_ref.dtype), w2_ref[...],
                preferred_element_type=jnp.float32) + b2_ref[...]
    o_ref[...] = y.astype(o_ref.dtype)


def _hid_tiled_kernel(x_ref, w1_ref, b1_ref, w2_ref, b2_ref, o_ref, acc_ref):
    """Hidden dim streamed on the last grid axis; f32 accumulator in VMEM."""
    k = pl.program_id(1)

    @pl.when(k == 0)
    def _():
        acc_ref[...] = jnp.zeros_like(acc_ref)

    x = x_ref[...].astype(w1_ref.dtype)
    h = jnp.dot(x, w1_ref[...], preferred_element_type=jnp.float32) + b1_ref[...]
    h = jnp.maximum(h, 0.0)
    acc_ref[...] += jnp.dot(h.astype(w2_ref.dtype), w2_ref[...],
                            preferred_element_type=jnp.float32)

    @pl.when(k == pl.num_programs(1) - 1)
    def _():
        o_ref[...] = (acc_ref[...] + b2_ref[...]).astype(o_ref.dtype)


# --------------------------------------------------------------------------- #
# Wrappers
# --------------------------------------------------------------------------- #
def prepare_params(w1, b1, w2, b2, *, compute_dtype=None):
    """One-time parameter prep (hoisted out of the per-call forward).

    Biases are reshaped to (1, dim) rows for in-kernel broadcast.  Optionally
    cast the weight matrices to a narrower MXU-native dtype (jnp.bfloat16 on
    v5e/v6e/v7x); biases stay f32 since accumulation is f32.
    """
    if b1.ndim == 1:
        b1 = b1[None, :]
    if b2.ndim == 1:
        b2 = b2[None, :]
    if compute_dtype is not None:
        w1 = w1.astype(compute_dtype)
        w2 = w2.astype(compute_dtype)
    return w1, b1, w2, b2


def _forward_hid_tiled(x, w1, b1, w2, b2, *, batch_block, hid_block):
    B, inp_dim = x.shape
    hid_dim = w1.shape[1]
    out_dim = w2.shape[1]
    isz = x.dtype.itemsize
    wsz = w1.dtype.itemsize

    # The hid axis feeds an un-masked accumulation, so it must divide evenly.
    # Zero-padding is exact (zero W1 cols -> h=relu(0)=0 -> zero W2 rows).
    # TODO(synk): for static params do this padding once in prepare_params.
    hid_p = _round_up(hid_dim, hid_block)
    if hid_p != hid_dim:
        w1 = jnp.pad(w1, ((0, 0), (0, hid_p - hid_dim)))
        b1 = jnp.pad(b1, ((0, 0), (0, hid_p - hid_dim)))
        w2 = jnp.pad(w2, ((0, hid_p - hid_dim), (0, 0)))

    tb = B if B <= batch_block else min(_round_up(batch_block, SUBLANE), B)
    nb = pl.cdiv(B, tb)
    nk = hid_p // hid_block

    need = (2 * tb * inp_dim * isz
            + 2 * (inp_dim * hid_block + hid_block) * wsz    # w1/b1 blocks
            + 2 * hid_block * out_dim * wsz                  # w2 blocks
            + 2 * out_dim * 4                                # b2
            + 2 * tb * out_dim * isz                         # output blocks
            + tb * out_dim * 4                               # acc scratch
            + tb * hid_block * 4)                            # hidden intermediate

    return pl.pallas_call(
        _hid_tiled_kernel,
        out_shape=jax.ShapeDtypeStruct((B, out_dim), x.dtype),
        grid=(nb, nk),
        in_specs=[
            pl.BlockSpec((tb, inp_dim), lambda i, k: (i, 0)),
            pl.BlockSpec((inp_dim, hid_block), lambda i, k: (0, k)),
            pl.BlockSpec((1, hid_block), lambda i, k: (0, k)),
            pl.BlockSpec((hid_block, out_dim), lambda i, k: (k, 0)),
            pl.BlockSpec((1, out_dim), lambda i, k: (0, 0)),
        ],
        out_specs=pl.BlockSpec((tb, out_dim), lambda i, k: (i, 0)),
        scratch_shapes=[pltpu.VMEM((tb, out_dim), jnp.float32)],
        compiler_params=_compiler_params(
            need, dimension_semantics=("parallel", "arbitrary")),
    )(x, w1, b1, w2, b2)


def mlp_forward(x, w1, b1, w2, b2, *, batch_block=512, hid_block=None):
    """y = relu(x @ w1 + b1) @ w2 + b2  (nn.Linear semantics, W pre-transposed).

    x: (B, inp); w1: (inp, hid); b1: (1, hid); w2: (hid, out); b2: (1, out).
    """
    B, inp_dim = x.shape
    hid_dim = w1.shape[1]
    out_dim = w2.shape[1]
    isz = x.dtype.itemsize

    w_bytes = (w1.size * w1.dtype.itemsize + b1.size * b1.dtype.itemsize
               + w2.size * w2.dtype.itemsize + b2.size * b2.dtype.itemsize)

    # Large resident weights (or an explicit hid_block) -> stream the hidden
    # dim instead of keeping W1/W2 fully VMEM-resident (v7x: 64 MiB VMEM).
    if hid_block is not None or w_bytes > WEIGHT_VMEM_BUDGET:
        th = hid_block if hid_block is not None else 512
        th = max(LANE, _round_up(th, LANE))        # lane-aligned hid tile
        return _forward_hid_tiled(x, w1, b1, w2, b2,
                                  batch_block=batch_block, hid_block=th)

    if B <= batch_block:
        # Small batch: single block, no grid, no pipeline prologue/epilogue.
        need = (x.size * isz + w_bytes + B * out_dim * isz
                + B * hid_dim * 4 + B * out_dim * 4)
        return pl.pallas_call(
            _fused_kernel,
            out_shape=jax.ShapeDtypeStruct((B, out_dim), x.dtype),
            in_specs=[pl.BlockSpec(memory_space=pltpu.MemorySpace.VMEM)] * 5,
            out_specs=pl.BlockSpec(memory_space=pltpu.MemorySpace.VMEM),
            compiler_params=_compiler_params(need),
        )(x, w1, b1, w2, b2)

    # Large batch: tile the batch on a "parallel" grid axis with big tiles
    # (default 512 rows) so per-grid-step overhead amortizes.
    tb = min(_round_up(batch_block, SUBLANE), _round_up(B, SUBLANE))
    nb = pl.cdiv(B, tb)
    if nb > 1 and nb % 2 == 1:
        # v7x has 2 TensorCores sharing the "parallel" axis; an odd tile count
        # leaves one core idle for the last tile.  Re-split into an even count.
        tb = _round_up(pl.cdiv(B, nb + 1), SUBLANE)
        nb = pl.cdiv(B, tb)

    need = (w_bytes                                   # single-buffered weights
            + 2 * tb * inp_dim * isz + 2 * tb * out_dim * isz
            + tb * hid_dim * 4 + tb * out_dim * 4)

    def call(single_buffer_weights):
        if single_buffer_weights:
            # Batch-invariant index_maps + single buffering: one resident copy
            # of each weight (halves weight VMEM footprint; matters on v7x/v5e).
            def w_spec(shape):
                return pl.BlockSpec(shape, lambda i: (0, 0),
                                    pipeline_mode=pl.Buffered(1))
        else:
            def w_spec(shape):
                return pl.BlockSpec(shape, lambda i: (0, 0))
        return pl.pallas_call(
            _fused_kernel,
            out_shape=jax.ShapeDtypeStruct((B, out_dim), x.dtype),
            grid=(nb,),
            in_specs=[
                pl.BlockSpec((tb, inp_dim), lambda i: (i, 0)),
                w_spec((inp_dim, hid_dim)),
                w_spec((1, hid_dim)),
                w_spec((hid_dim, out_dim)),
                w_spec((1, out_dim)),
            ],
            out_specs=pl.BlockSpec((tb, out_dim), lambda i: (i, 0)),
            compiler_params=_compiler_params(
                need, dimension_semantics=("parallel",)),
        )(x, w1, b1, w2, b2)

    try:
        return call(True)
    except Exception:
        # Fallback for JAX builds without BlockSpec pipeline_mode / Buffered(1).
        return call(False)


# --------------------------------------------------------------------------- #
# Init + reference
# --------------------------------------------------------------------------- #
def init_params(key, inp_dim, hid_dim, out_dim, dtype=jnp.float32):
    """Deterministic init mimicking nn.Linear's uniform(-1/sqrt(fan_in), ...)."""
    k1, k2, k3, k4 = jax.random.split(key, 4)
    lim1 = 1.0 / jnp.sqrt(inp_dim)
    lim2 = 1.0 / jnp.sqrt(hid_dim)
    w1 = jax.random.uniform(k1, (inp_dim, hid_dim), dtype, -lim1, lim1)
    b1 = jax.random.uniform(k2, (1, hid_dim), dtype, -lim1, lim1)
    w2 = jax.random.uniform(k3, (hid_dim, out_dim), dtype, -lim2, lim2)
    b2 = jax.random.uniform(k4, (1, out_dim), dtype, -lim2, lim2)
    return w1, b1, w2, b2


def reference_forward(x, w1, b1, w2, b2):
    h = jnp.maximum(x @ w1 + b1, 0.0)
    return h @ w2 + b2


if __name__ == "__main__":
    inp_dim, hid_dim, out_dim = 32, 64, 16
    key = jax.random.PRNGKey(0)
    kx, kp, kx2, kp3 = jax.random.split(key, 4)
    w1, b1, w2, b2 = prepare_params(*init_params(kp, inp_dim, hid_dim, out_dim))

    # 1) Small-batch path (grid-less single block).
    B = 8
    x = jax.random.normal(kx, (B, inp_dim), jnp.float32)
    out = jax.block_until_ready(mlp_forward(x, w1, b1, w2, b2))
    ref = reference_forward(x, w1, b1, w2, b2)
    assert out.shape == (B, out_dim)
    assert jnp.allclose(out, ref, atol=2e-5, rtol=1e-5), "mismatch (small-batch path)"

    # 2) Gridded batch path with a ragged final block (no wrapper pad/slice).
    B2 = 200
    x2 = jax.random.normal(kx2, (B2, inp_dim), jnp.float32)
    out2 = jax.block_until_ready(mlp_forward(x2, w1, b1, w2, b2, batch_block=64))
    ref2 = reference_forward(x2, w1, b1, w2, b2)
    assert out2.shape == (B2, out_dim)
    assert jnp.allclose(out2, ref2, atol=2e-5, rtol=1e-5), "mismatch (gridded path)"

    # 3) Hid-tiled fallback path (forced via hid_block) at a small shape.
    hid3 = 256
    w1c, b1c, w2c, b2c = prepare_params(*init_params(kp3, inp_dim, hid3, out_dim))
    out3 = jax.block_until_ready(
        mlp_forward(x2, w1c, b1c, w2c, b2c, batch_block=64, hid_block=128))
    ref3 = reference_forward(x2, w1c, b1c, w2c, b2c)
    assert out3.shape == (B2, out_dim)
    assert jnp.allclose(out3, ref3, atol=2e-4, rtol=2e-5), "mismatch (hid-tiled path)"

    # 4) bf16 MXU path (weights bf16, f32 accumulation) — looser tolerance.
    w1b, b1b, w2b, b2b = prepare_params(w1, b1, w2, b2, compute_dtype=jnp.bfloat16)
    out4 = jax.block_until_ready(mlp_forward(x2, w1b, b1b, w2b, b2b, batch_block=64))
    ref4 = reference_forward(x2, w1, b1, w2, b2)
    assert out4.shape == (B2, out_dim)
    assert jnp.allclose(out4, ref4, atol=5e-2, rtol=5e-2), "mismatch (bf16 path)"

    print("KERNEL_OK")
</pallas_src>

<mosaic_0001>
module attributes {stable_mosaic.version = 11 : i64} {
  func.func @_fused_kernel(%arg0: memref<8x32xf32, #tpu.memory_space<vmem>>, %arg1: memref<32x64xf32, #tpu.memory_space<vmem>>, %arg2: memref<1x64xf32, #tpu.memory_space<vmem>>, %arg3: memref<64x16xf32, #tpu.memory_space<vmem>>, %arg4: memref<1x16xf32, #tpu.memory_space<vmem>>, %arg5: memref<8x16xf32, #tpu.memory_space<vmem>>) attributes {dimension_semantics = [], scalar_prefetch = 0 : i64, scratch_operands = 0 : i64, tpu.core_type = #tpu.core_type<tc>} {
    %c0 = arith.constant 0 : index
    %c0_0 = arith.constant 0 : index
    %0 = vector.load %arg0[%c0, %c0_0] : memref<8x32xf32, #tpu.memory_space<vmem>>, vector<8x32xf32>
    %c0_1 = arith.constant 0 : index
    %c0_2 = arith.constant 0 : index
    %1 = vector.load %arg1[%c0_1, %c0_2] : memref<32x64xf32, #tpu.memory_space<vmem>>, vector<32x64xf32>
    %cst = arith.constant dense<0.000000e+00> : vector<8x64xf32>
    %2 = tpu.matmul %0, %1, %cst {dimension_numbers = #tpu.dot_dimension_numbers<[1], [0], [0], [1], [0, 0, 1, 1], [], []>} : vector<8x32xf32>, vector<32x64xf32>, vector<8x64xf32> -> vector<8x64xf32>
    %c0_3 = arith.constant 0 : index
    %c0_4 = arith.constant 0 : index
    %3 = vector.load %arg2[%c0_3, %c0_4] : memref<1x64xf32, #tpu.memory_space<vmem>>, vector<1x64xf32>
    %4 = vector.broadcast %3 : vector<1x64xf32> to vector<8x64xf32>
    %5 = arith.addf %2, %4 : vector<8x64xf32>
    %cst_5 = arith.constant 0.000000e+00 : f32
    %6 = vector.broadcast %cst_5 : f32 to vector<8x64xf32>
    %7 = arith.maximumf %5, %6 : vector<8x64xf32>
    %c0_6 = arith.constant 0 : index
    %c0_7 = arith.constant 0 : index
    %8 = vector.load %arg3[%c0_6, %c0_7] : memref<64x16xf32, #tpu.memory_space<vmem>>, vector<64x16xf32>
    %cst_8 = arith.constant dense<0.000000e+00> : vector<8x16xf32>
    %9 = tpu.matmul %7, %8, %cst_8 {dimension_numbers = #tpu.dot_dimension_numbers<[1], [0], [0], [1], [0, 0, 1, 1], [], []>} : vector<8x64xf32>, vector<64x16xf32>, vector<8x16xf32> -> vector<8x16xf32>
    %c0_9 = arith.constant 0 : index
    %c0_10 = arith.constant 0 : index
    %10 = vector.load %arg4[%c0_9, %c0_10] : memref<1x16xf32, #tpu.memory_space<vmem>>, vector<1x16xf32>
    %11 = vector.broadcast %10 : vector<1x16xf32> to vector<8x16xf32>
    %12 = arith.addf %9, %11 : vector<8x16xf32>
    %c0_11 = arith.constant 0 : index
    %c0_12 = arith.constant 0 : index
    %13 = vector.load %arg5[%c0_11, %c0_12] : memref<8x16xf32, #tpu.memory_space<vmem>>, vector<8x16xf32>
    tpu.vector_store %arg5[%c0_11, %c0_12], %12 {strides = array<i32>} : memref<8x16xf32, #tpu.memory_space<vmem>>, vector<8x16xf32>,
    return
  }
}

</mosaic_0001>

<llo_original>
// kernel: tpu_custom_call.1
$region0: #{tpu_custom_call.1}
  #allocation0 [shape = 'u32[]', space=smem, size = 0x4, offset = 0x4, fixed_abs, tag = 'smem constant byte address 0x4 - core index']
  #allocation1 [shape = 'u32[144,128]{1,0:T(1,128)}', space=vmem, size = 0x12000, scoped, tag = 'internal scratch']
  %s0 = inlined_call_operand.vmem [shape: f32[8,32], index: 0, kind: input, shape index: {}]
  %s1 = inlined_call_operand.vmem [shape: f32[32,64], index: 1, kind: input, shape index: {}]
  %s2 = inlined_call_operand.vmem [shape: f32[1,64], index: 2, kind: input, shape index: {}]
  %s3 = inlined_call_operand.vmem [shape: f32[64,16], index: 3, kind: input, shape index: {}]
  %s4 = inlined_call_operand.vmem [shape: f32[1,16], index: 4, kind: input, shape index: {}]
  %s5 = inlined_call_operand.hbm [shape: f32[8,16], index: 5, kind: output, shape index: {}]
  %s6 = sld [smem:[#allocation0]]
  $region30: #{tpu_custom_call.1} parent=0
    _
  %s8 = ssub.s32 1, %s6
  %s9 = scalar_select 0, %s8, %s6
  $region1: #{tpu_custom_call.1} parent=0
    #allocation2 [shape = 'u8[4096]{0}', space=vmem, size = 0x1000, scoped, tag = 'output window, operand 0, single buffered']
    #allocation3 [shape = 's32[1]{0}', space=sflag, size = 0x4, scoped, tag = 'scoped memory for tpu_custom_call.1']
    %10 = vsyncpa [#allocation3], 0
    // Predicated region
    $region2: #{tpu_custom_call.1} parent=1 // pred_check
      _
    $region3: #{tpu_custom_call.1} parent=1 // pred_check_branch
      %12 = sbr.rel (0) target = $region5
    $region4: #{tpu_custom_call.1} parent=1 // pred_region
      _
    $region5: #{tpu_custom_call.1} parent=1 // pred_fallthru
      _
    // Predicated region
    $region6: #{tpu_custom_call.1} parent=1 // pred_check
      _
    $region7: #{tpu_custom_call.1} parent=1 // pred_check_branch
      %14 = sbr.rel (0) target = $region9
    $region8: #{tpu_custom_call.1} parent=1 // pred_region
      _
    $region9: #{tpu_custom_call.1} parent=1 // pred_fallthru
      _
    // Predicated region
    $region10: #{tpu_custom_call.1} parent=1 // pred_check
      _
    $region11: #{tpu_custom_call.1} parent=1 // pred_check_branch
      %16 = sbr.rel (0) target = $region13
    $region12: #{tpu_custom_call.1} parent=1 // pred_region
      _
    $region13: #{tpu_custom_call.1} parent=1 // pred_fallthru
      _
    // Predicated region
    $region14: #{tpu_custom_call.1} parent=1 // pred_check
      _
    $region15: #{tpu_custom_call.1} parent=1 // pred_check_branch
      %18 = sbr.rel (0) target = $region17
    $region16: #{tpu_custom_call.1} parent=1 // pred_region
      _
    $region17: #{tpu_custom_call.1} parent=1 // pred_fallthru
      _
    // Predicated region
    $region18: #{tpu_custom_call.1} parent=1 // pred_check
      _
    $region19: #{tpu_custom_call.1} parent=1 // pred_check_branch
      %20 = sbr.rel (0) target = $region21
    $region20: #{tpu_custom_call.1} parent=1 // pred_region
      _
    $region21: #{tpu_custom_call.1} parent=1 // pred_fallthru
      _
    %v21 = vld [vmem:[%s0] sm:$0xff]
    %v22 = vld [vmem:[%s1] sm:$0xff]
    %v23 = vld [vmem:[%s1 + $0x8] sm:$0xff]
    %v24 = vld [vmem:[%s1 + $0x10] sm:$0xff]
    %v25 = vld [vmem:[%s1 + $0x18] sm:$0xff]
    %v26 = vld [vmem:[%s2] sm:$0x1]
    %v28 = vlaneseq
    %v29 = vshrl.u32 %v28, 7
    %v30 = vsub.s32 0, %v29
    %v31 = vrot.slane %v26, %v30
    %vm33 = vcmask 261120
    %v35 = vsel %vm33, %v21, 0
    %37 = vmatprep.subr.mxu0 0.0
    %38 = vmatpush1.msra.mxu0 0.0
    %39 = vmatprep.subr.mxu0 0.0
    %40 = vmatpush1.msra.mxu0 0.0
    %41 = vmatprep.subr.mxu0 0.0
    %42 = vmatpush1.msra.mxu0 0.0
    %43 = vmatprep.subr.mxu0 0.0
    %44 = vmatpush1.msra.mxu0 0.0
    %45 = vmatprep.subr.mxu0 0.0
    %46 = vmatpush1.msra.mxu0 0.0
    %47 = vmatprep.subr.mxu0 0.0
    %48 = vmatpush1.msra.mxu0 0.0
    %49 = vmatprep.subr.mxu0 0.0
    %50 = vmatpush1.msra.mxu0 0.0
    %51 = vmatprep.subr.mxu0 0.0
    %52 = vmatpush1.msra.mxu0 0.0
    %53 = vmatprep.subr.mxu0 0.0
    %54 = vmatpush1.msra.mxu0 0.0
    %55 = vmatprep.subr.mxu0 0.0
    %56 = vmatpush1.msra.mxu0 0.0
    %57 = vmatprep.subr.mxu0 0.0
    %58 = vmatpush1.msra.mxu0 0.0
    %59 = vmatprep.subr.mxu0 0.0
    %60 = vmatpush1.msra.mxu0 0.0
    %61 = vmatprep.subr.mxu0 0.0
    %62 = vmatpush1.msra.mxu0 %v25
    %63 = vmatprep.subr.mxu0 0.0
    %64 = vmatpush1.msra.mxu0 %v24
    %65 = vmatprep.subr.mxu0 0.0
    %66 = vmatpush1.msra.mxu0 %v23
    %67 = vmatprep.subr.mxu0 0.0
    %68 = vmatpush1.msra.mxu0 %v22
    %69 = vmatprep.subr.mxu0 0.0
    %70 = vmatpush2.msra.mxu0 0.0
    %71 = vmatprep.subr.mxu0 0.0
    %72 = vmatpush2.msra.mxu0 0.0
    %73 = vmatprep.subr.mxu0 0.0
    %74 = vmatpush2.msra.mxu0 0.0
    %75 = vmatprep.subr.mxu0 0.0
    %76 = vmatpush2.msra.mxu0 0.0
    %77 = vmatprep.subr.mxu0 0.0
    %78 = vmatpush2.msra.mxu0 0.0
    %79 = vmatprep.subr.mxu0 0.0
    %80 = vmatpush2.msra.mxu0 0.0
    %81 = vmatprep.subr.mxu0 0.0
    %82 = vmatpush2.msra.mxu0 0.0
    %83 = vmatprep.subr.mxu0 0.0
    %84 = vmatpush2.msra.mxu0 0.0
    %85 = vmatprep.subr.mxu0 0.0
    %86 = vmatpush2.msra.mxu0 0.0
    %87 = vmatprep.subr.mxu0 0.0
    %88 = vmatpush2.msra.mxu0 0.0
    %89 = vmatprep.subr.mxu0 0.0
    %90 = vmatpush2.msra.mxu0 0.0
    %91 = vmatprep.subr.mxu0 0.0
    %92 = vmatpush2.msra.mxu0 0.0
    %93 = vmatprep.subr.mxu0 0.0
    %94 = vmatpush2.msra.mxu0 0.0
    %95 = vmatprep.subr.mxu0 0.0
    %96 = vmatpush2.msra.mxu0 0.0
    %97 = vmatprep.subr.mxu0 0.0
    %98 = vmatpush2.msra.mxu0 0.0
    %99 = vmatprep.subr.mxu0 0.0
    %100 = vmatpush2.msra.mxu0 0.0
    %101 = vmatprep.mubr.f32.mxu0 0.0
    %102 = vmatmul.mubr.f32.gmra.mxu0 %v35
    %v103 = vpop.f32.mrf.mxu0
    %v104 = vadd.f32 %v31, %v103
    %v105 = vpop.f32.mrf.mxu0
    %106 = vdwg.mxu0
    %v107 = vmax.f32 %v104, 0.0
    %v108 = vld [vmem:[%s3] sm:$0xff]
    %v109 = vld [vmem:[%s3 + $0x8] sm:$0xff]
    %v110 = vld [vmem:[%s3 + $0x10] sm:$0xff]
    %v111 = vld [vmem:[%s3 + $0x18] sm:$0xff]
    %v112 = vld [vmem:[%s3 + $0x20] sm:$0xff]
    %v113 = vld [vmem:[%s3 + $0x28] sm:$0xff]
    %v114 = vld [vmem:[%s3 + $0x30] sm:$0xff]
    %v115 = vld [vmem:[%s3 + $0x38] sm:$0xff]
    %v116 = vld [vmem:[%s4] sm:$0x1]
    %v118 = vlaneseq
    %v119 = vshrl.u32 %v118, 7
    %v120 = vsub.s32 0, %v119
    %v121 = vrot.slane %v116, %v120
    %vm123 = vcmask 523264
    %v125 = vsel %vm123, %v107, 0
    %127 = vmatprep.subr.mxu0 0.0
    %128 = vmatpush1.msra.mxu0 0.0
    %129 = vmatprep.subr.mxu0 0.0
    %130 = vmatpush1.msra.mxu0 0.0
    %131 = vmatprep.subr.mxu0 0.0
    %132 = vmatpush1.msra.mxu0 0.0
    %133 = vmatprep.subr.mxu0 0.0
    %134 = vmatpush1.msra.mxu0 0.0
    %135 = vmatprep.subr.mxu0 0.0
    %136 = vmatpush1.msra.mxu0 0.0
    %137 = vmatprep.subr.mxu0 0.0
    %138 = vmatpush1.msra.mxu0 0.0
    %139 = vmatprep.subr.mxu0 0.0
    %140 = vmatpush1.msra.mxu0 0.0
    %141 = vmatprep.subr.mxu0 0.0
    %142 = vmatpush1.msra.mxu0 0.0
    %143 = vmatprep.subr.mxu0 0.0
    %144 = vmatpush1.msra.mxu0 %v115
    %145 = vmatprep.subr.mxu0 0.0
    %146 = vmatpush1.msra.mxu0 %v114
    %147 = vmatprep.subr.mxu0 0.0
    %148 = vmatpush1.msra.mxu0 %v113
    %149 = vmatprep.subr.mxu0 0.0
    %150 = vmatpush1.msra.mxu0 %v112
    %151 = vmatprep.subr.mxu0 0.0
    %152 = vmatpush1.msra.mxu0 %v111
    %153 = vmatprep.subr.mxu0 0.0
    %154 = vmatpush1.msra.mxu0 %v110
    %155 = vmatprep.subr.mxu0 0.0
    %156 = vmatpush1.msra.mxu0 %v109
    %157 = vmatprep.subr.mxu0 0.0
    %158 = vmatpush1.msra.mxu0 %v108
    %159 = vmatprep.subr.mxu0 0.0
    %160 = vmatpush2.msra.mxu0 0.0
    %161 = vmatprep.subr.mxu0 0.0
    %162 = vmatpush2.msra.mxu0 0.0
    %163 = vmatprep.subr.mxu0 0.0
    %164 = vmatpush2.msra.mxu0 0.0
    %165 = vmatprep.subr.mxu0 0.0
    %166 = vmatpush2.msra.mxu0 0.0
    %167 = vmatprep.subr.mxu0 0.0
    %168 = vmatpush2.msra.mxu0 0.0
    %169 = vmatprep.subr.mxu0 0.0
    %170 = vmatpush2.msra.mxu0 0.0
    %171 = vmatprep.subr.mxu0 0.0
    %172 = vmatpush2.msra.mxu0 0.0
    %173 = vmatprep.subr.mxu0 0.0
    %174 = vmatpush2.msra.mxu0 0.0
    %175 = vmatprep.subr.mxu0 0.0
    %176 = vmatpush2.msra.mxu0 0.0
    %177 = vmatprep.subr.mxu0 0.0
    %178 = vmatpush2.msra.mxu0 0.0
    %179 = vmatprep.subr.mxu0 0.0
    %180 = vmatpush2.msra.mxu0 0.0
    %181 = vmatprep.subr.mxu0 0.0
    %182 = vmatpush2.msra.mxu0 0.0
    %183 = vmatprep.subr.mxu0 0.0
    %184 = vmatpush2.msra.mxu0 0.0
    %185 = vmatprep.subr.mxu0 0.0
    %186 = vmatpush2.msra.mxu0 0.0
    %187 = vmatprep.subr.mxu0 0.0
    %188 = vmatpush2.msra.mxu0 0.0
    %189 = vmatprep.subr.mxu0 0.0
    %190 = vmatpush2.msra.mxu0 0.0
    %191 = vmatprep.mubr.f32.mxu0 0.0
    %192 = vmatmul.mubr.f32.gmra.mxu0 %v125
    %v193 = vpop.f32.mrf.mxu0
    %v194 = vadd.f32 %v121, %v193
    %v195 = vpop.f32.mrf.mxu0
    %196 = vdwg.mxu0
    %vm197 = vcmask 130048
    %198 = vst.msk [vmem:[#allocation2] sm:$0xff] %vm197, %v194
    // Predicated region
    $region22: #{tpu_custom_call.1} parent=1 // pred_check
      _
    $region23: #{tpu_custom_call.1} parent=1 // pred_check_branch
      %200 = sbr.rel (0) target = $region25
    $region24: #{tpu_custom_call.1} parent=1 // pred_region
      %s202 = ssub.s32 128, 128
      %203 = vsyncadd [#allocation3], %s202
      %s205 = sshll.u32 [#allocation2], 4
      %s206 = int_to_ptr.vmem [resolvable:$true] %s205
      %208 = dma.vmem_to_hbm [thread:$0]  %s206, 128, %s5, [#allocation3]
    $region25: #{tpu_custom_call.1} parent=1 // pred_fallthru
      _
    // Predicated region
    $region26: #{tpu_custom_call.1} parent=1 // pred_check
      _
    $region27: #{tpu_custom_call.1} parent=1 // pred_check_branch
      %210 = sbr.rel (0) target = $region29
    $region28: #{tpu_custom_call.1} parent=1 // pred_region
      %211 = dma.done [#allocation3], 128
    $region29: #{tpu_custom_call.1} parent=1 // pred_fallthru
      _
    %212 = vsyncpa [#allocation3], 1

</llo_original>
